<compile_context>
chip_gen: v6e
topology: v6e:2x2x1
jax: 0.10.0
libtpu: 0.0.40
codegen_flags: <defaults>
</compile_context>

<pallas_src>
import jax
import jax.numpy as jnp
from jax.experimental import pallas as pl
from jax.experimental.pallas import tpu as pltpu


def _logreg_kernel(wb_ref, x_ref, o_ref):
    # wb_ref: SMEM (3,)  = [w0, w1, b]
    # x_ref : VMEM (2, TN) feature-major, lane-dense
    # o_ref : VMEM (1, TN) lane-dense
    w0 = wb_ref[0]
    w1 = wb_ref[1]
    b = wb_ref[2]
    x0 = x_ref[0:1, :]                    # (1, TN) static slice (free)
    x1 = x_ref[1:2, :]
    z = x0 * w0 + x1 * w1 + b             # two VPU multiply-adds, no MXU
    e = jnp.exp(-z)                       # EUP
    o_ref[...] = 1.0 / (1.0 + e)          # exact sigmoid


def logistic_regression(x, w, b, *, max_tile=16384):
    """x: (N, 2) f32, w: (1, 2) f32 (PyTorch Linear layout), b: (1,) f32 -> (N, 1) f32."""
    n = x.shape[0]
    lane = 128
    n_pad = pl.cdiv(n, lane) * lane
    tn = min(n_pad, max_tile)             # lane-tile per grid step (multiple of 128)
    n_pad = pl.cdiv(n_pad, tn) * tn
    grid = n_pad // tn

    # Feature-major, lane-dense, zero-padded input: (2, N_pad).
    xt = jnp.zeros((2, n_pad), dtype=jnp.float32).at[:, :n].set(x.T)

    # Pack the 3 scalars for SMEM scalar-prefetch: [w0, w1, b].
    wb = jnp.concatenate([w.reshape(-1), b.reshape(-1)]).astype(jnp.float32)

    out = pl.pallas_call(
        _logreg_kernel,
        out_shape=jax.ShapeDtypeStruct((1, n_pad), jnp.float32),
        grid_spec=pltpu.PrefetchScalarGridSpec(
            num_scalar_prefetch=1,                      # wb -> SMEM
            grid=(grid,),
            in_specs=[pl.BlockSpec((2, tn), lambda i, wb: (0, i))],
            out_specs=pl.BlockSpec((1, tn), lambda i, wb: (0, i)),
        ),
        compiler_params=pltpu.CompilerParams(
            dimension_semantics=("parallel",)),         # shard N tiles on v7x
    )(wb, xt)

    # Strip lane padding and restore the (N, 1) PyTorch output shape.
    return out[0, :n].reshape(n, 1)


if __name__ == "__main__":
    key = jax.random.PRNGKey(0)
    k_x0, k_x1, k_w, k_b = jax.random.split(key, 4)

    # Mirror the torch data construction: two gaussian clusters at +2 / -2.
    n_half = 100
    x0 = 2.0 + jax.random.normal(k_x0, (n_half, 2), dtype=jnp.float32)
    x1 = -2.0 + jax.random.normal(k_x1, (n_half, 2), dtype=jnp.float32)
    x = jnp.concatenate([x0, x1], axis=0)            # (200, 2) float32

    # Deterministic nn.Linear(2, 1)-style init: U(-1/sqrt(2), 1/sqrt(2)).
    bound = 1.0 / jnp.sqrt(2.0)
    w = jax.random.uniform(k_w, (1, 2), minval=-bound, maxval=bound,
                           dtype=jnp.float32)        # PyTorch weight shape (out, in)
    b = jax.random.uniform(k_b, (1,), minval=-bound, maxval=bound,
                           dtype=jnp.float32)

    out = logistic_regression(x, w, b)
    out = jax.block_until_ready(out)

    # Reference check against plain JAX.
    ref = jax.nn.sigmoid(x @ w.T + b.reshape(1, 1))
    assert out.shape == (200, 1)
    assert jnp.allclose(out, ref, atol=1e-5, rtol=1e-5)

    print("KERNEL_OK")
</pallas_src>

<mosaic_0001>
module attributes {stable_mosaic.version = 11 : i64} {
  func.func @_logreg_kernel(%arg0: i32, %arg1: memref<3xf32, #tpu.memory_space<smem>>, %arg2: memref<2x256xf32, #tpu.memory_space<vmem>>, %arg3: memref<1x256xf32, #tpu.memory_space<vmem>>) attributes {dimension_semantics = [#tpu.dimension_semantics<parallel>], iteration_bounds = array<i64: 1>, scalar_prefetch = 1 : i64, scratch_operands = 0 : i64, tpu.core_type = #tpu.core_type<tc>, window_params = [{transform_indices = @transform_0, window_bounds = array<i64: 2, 256>}, {transform_indices = @transform_1, window_bounds = array<i64: 1, 256>}]} {
    %c0 = arith.constant 0 : index
    %0 = memref.load %arg1[%c0] : memref<3xf32, #tpu.memory_space<smem>>
    %c1 = arith.constant 1 : index
    %1 = memref.load %arg1[%c1] : memref<3xf32, #tpu.memory_space<smem>>
    %c2 = arith.constant 2 : index
    %2 = memref.load %arg1[%c2] : memref<3xf32, #tpu.memory_space<smem>>
    %c0_0 = arith.constant 0 : index
    %c0_1 = arith.constant 0 : index
    %3 = vector.load %arg2[%c0_0, %c0_1] : memref<2x256xf32, #tpu.memory_space<vmem>>, vector<1x256xf32>
    %c1_2 = arith.constant 1 : index
    %c0_3 = arith.constant 0 : index
    %4 = vector.load %arg2[%c1_2, %c0_3] : memref<2x256xf32, #tpu.memory_space<vmem>>, vector<1x256xf32>
    %5 = vector.broadcast %0 : f32 to vector<1x256xf32>
    %6 = arith.mulf %3, %5 : vector<1x256xf32>
    %7 = vector.broadcast %1 : f32 to vector<1x256xf32>
    %8 = arith.mulf %4, %7 : vector<1x256xf32>
    %9 = arith.addf %6, %8 : vector<1x256xf32>
    %10 = vector.broadcast %2 : f32 to vector<1x256xf32>
    %11 = arith.addf %9, %10 : vector<1x256xf32>
    %cst = arith.constant 0.000000e+00 : f32
    %12 = vector.broadcast %cst : f32 to vector<1x256xf32>
    %13 = arith.subf %12, %11 : vector<1x256xf32>
    %14 = math.exp %13 : vector<1x256xf32>
    %cst_4 = arith.constant 1.000000e+00 : f32
    %15 = vector.broadcast %cst_4 : f32 to vector<1x256xf32>
    %16 = arith.addf %15, %14 : vector<1x256xf32>
    %cst_5 = arith.constant 1.000000e+00 : f32
    %17 = vector.broadcast %cst_5 : f32 to vector<1x256xf32>
    %18 = arith.divf %17, %16 : vector<1x256xf32>
    %c0_6 = arith.constant 0 : index
    %c0_7 = arith.constant 0 : index
    %19 = vector.load %arg3[%c0_6, %c0_7] : memref<1x256xf32, #tpu.memory_space<vmem>>, vector<1x256xf32>
    tpu.vector_store %arg3[%c0_6, %c0_7], %18 {strides = array<i32>} : memref<1x256xf32, #tpu.memory_space<vmem>>, vector<1x256xf32>,
    return
  }
  func.func @transform_0(%arg0: i32, %arg1: memref<3xf32, #tpu.memory_space<smem>>) -> (i32, i32) {
    %c0_i32 = arith.constant 0 : i32
    %c0_i32_0 = arith.constant 0 : i32
    return %c0_i32, %arg0 : i32, i32
  }
  func.func @transform_1(%arg0: i32, %arg1: memref<3xf32, #tpu.memory_space<smem>>) -> (i32, i32) {
    %c0_i32 = arith.constant 0 : i32
    %c0_i32_0 = arith.constant 0 : i32
    return %c0_i32, %arg0 : i32, i32
  }
}

</mosaic_0001>

<llo_original>
// kernel: tpu_custom_call.1
$region0: #{tpu_custom_call.1}
  #allocation0 [shape = 'u32[]', space=smem, size = 0x4, offset = 0x4, fixed_abs, tag = 'smem constant byte address 0x4 - core index']
  #allocation1 [shape = 'u32[144,128]{1,0:T(1,128)}', space=vmem, size = 0x12000, scoped, tag = 'internal scratch']
  #allocation2 [shape = 's32[1]{0}', space=sflag, size = 0x4, scoped, tag = 'scoped memory for tpu_custom_call.1']
  #allocation3 [shape = 'u8[512]{0}', space=smem, size = 0x200, scoped, tag = 'prefetched SMEM operand 0']
  %s0 = inlined_call_operand.hbm [shape: f32[3], index: 0, kind: input, shape index: {}]
  %s1 = inlined_call_operand.hbm [shape: f32[2,256], index: 1, kind: input, shape index: {}]
  %s2 = inlined_call_operand.hbm [shape: f32[1,256], index: 2, kind: output, shape index: {}]
  %s3 = sld [smem:[#allocation0]]
  $region18: #{tpu_custom_call.1} parent=0
    _
  %s5 = ssub.s32 1, %s3
  %s6 = scalar_select 0, %s5, %s3
  %8 = dma.hbm_to_smem %s0, 16, [#allocation3], [#allocation2]
  %9 = dma.done [#allocation2], 16
  %10 = sfence
  $region1: #{tpu_custom_call.1} parent=0
    #allocation4 [shape = 'u8[2048]{0}', space=vmem, size = 0x800, scoped, tag = 'input window, operand 1, single buffered']
    #allocation5 [shape = 's32[1]{0}', space=sflag, size = 0x4, scoped, tag = 'scoped memory for tpu_custom_call.1']
    #allocation6 [shape = 's32[1]{0}', space=sflag, size = 0x4, scoped, tag = 'scoped memory for tpu_custom_call.1']
    #allocation7 [shape = 'u8[1024]{0}', space=vmem, size = 0x400, scoped, tag = 'output window, operand 0, single buffered']
    %11 = vsyncpa [#allocation5], 0
    %12 = vsyncpa [#allocation6], 0
    // Predicated region
    $region2: #{tpu_custom_call.1} parent=1 // pred_check
      _
    $region3: #{tpu_custom_call.1} parent=1 // pred_check_branch
      %14 = sbr.rel (0) target = $region5
    $region4: #{tpu_custom_call.1} parent=1 // pred_region
      %s16 = ssub.s32 64, 64
      %17 = vsyncadd [#allocation5], %s16
      %s19 = sshll.u32 [#allocation4], 4
      %s20 = int_to_ptr.vmem [resolvable:$true] %s19
      %22 = dma.hbm_to_vmem [thread:$0]  %s1, 64, %s20, [#allocation5]
    $region5: #{tpu_custom_call.1} parent=1 // pred_fallthru
      _
    // Predicated region
    $region6: #{tpu_custom_call.1} parent=1 // pred_check
      _
    $region7: #{tpu_custom_call.1} parent=1 // pred_check_branch
      %24 = sbr.rel (0) target = $region9
    $region8: #{tpu_custom_call.1} parent=1 // pred_region
      %25 = dma.done [#allocation5], 64
    $region9: #{tpu_custom_call.1} parent=1 // pred_fallthru
      _
    %s26 = sld [smem:[#allocation3]]
    %s27 = sld [smem:[#allocation3 + $0x1]]
    %s28 = sld [smem:[#allocation3 + $0x2]]
    %v29 = vld [vmem:[#allocation4] ss:$2 sm:$0x3]
    %s30 = scalar_lea.vmem [#allocation4], 1
    %v31 = vld [vmem:[%s30] ss:$2 sm:$0x3]
    %v32 = vstv %s26
    %v33 = vmul.f32 %v29, %v32
    %v34 = vstv %s27
    %v35 = vmul.f32 %v31, %v34
    %v36 = vadd.f32 %v33, %v35
    %v37 = vstv %s28
    %v38 = vadd.f32 %v36, %v37
    %v39 = vsub.f32 0.0, %v38
    %v40 = vmul.f32 %v39, 1.442695
    %v41 = vpow.pop %v40
    %v42 = vadd.f32 %v41, 1.0
    %v43 = vrcp.pop %v42
    %v44 = vmul.f32 1.0, %v43
    %v45 = vlaneseq
    %vm46 = vcmp.ge.s32.totalorder %v45, 0
    %vm47 = vcmp.lt.s32.totalorder %v45, 256
    %vm48 = vmand %vm46, %vm47
    %49 = vst.msk [vmem:[#allocation7] sm:$0x3] %vm48, %v44
    // Predicated region
    $region10: #{tpu_custom_call.1} parent=1 // pred_check
      _
    $region11: #{tpu_custom_call.1} parent=1 // pred_check_branch
      %51 = sbr.rel (0) target = $region13
    $region12: #{tpu_custom_call.1} parent=1 // pred_region
      %s53 = ssub.s32 32, 32
      %54 = vsyncadd [#allocation6], %s53
      %s56 = sshll.u32 [#allocation7], 4
      %s57 = int_to_ptr.vmem [resolvable:$true] %s56
      %59 = dma.vmem_to_hbm [thread:$0]  %s57, 32, %s2, [#allocation6]
    $region13: #{tpu_custom_call.1} parent=1 // pred_fallthru
      _
    // Predicated region
    $region14: #{tpu_custom_call.1} parent=1 // pred_check
      _
    $region15: #{tpu_custom_call.1} parent=1 // pred_check_branch
      %61 = sbr.rel (0) target = $region17
    $region16: #{tpu_custom_call.1} parent=1 // pred_region
      %62 = dma.done [#allocation6], 32
    $region17: #{tpu_custom_call.1} parent=1 // pred_fallthru
      _
    %63 = vsyncpa [#allocation5], 1
    %64 = vsyncpa [#allocation6], 1

</llo_original>
